<compile_context>
chip_gen: v6e
topology: v6e:2x2x1
jax: 0.10.0
libtpu: 0.0.40
codegen_flags: <defaults>
</compile_context>

<pallas_src>
import jax
import jax.numpy as jnp
from jax.experimental import pallas as pl
from jax.experimental.pallas import tpu as pltpu


def _linear_dynamics_kernel(t_ref, x_ref, v_ref, o_ref):
    # t_ref lives in SMEM: a single f32 scalar broadcast over the whole tile.
    t = t_ref[0]
    o_ref[...] = x_ref[...] + v_ref[...] * t


def _pick_row_block(n):
    """Full block for small inputs; otherwise the largest aligned row tile."""
    if n <= 1024:
        return n
    for rb in (1024, 512, 256, 128, 64, 32, 16, 8):
        if n % rb == 0:
            return rb
    return n  # fallback: single full block


def linear_dynamics(x, v, time):
    """Pallas equivalent of Linear_dynamics.forward(x, v)."""
    assert x.shape == v.shape and x.ndim == 2
    n, d = x.shape
    rb = _pick_row_block(n)
    grid = (n // rb,)

    return pl.pallas_call(
        _linear_dynamics_kernel,
        out_shape=jax.ShapeDtypeStruct(x.shape, x.dtype),
        grid=grid,
        in_specs=[
            pl.BlockSpec(memory_space=pltpu.SMEM),            # time: (1,) f32 scalar
            pl.BlockSpec((rb, d), lambda i: (i, 0)),           # x rows
            pl.BlockSpec((rb, d), lambda i: (i, 0)),           # v rows
        ],
        out_specs=pl.BlockSpec((rb, d), lambda i: (i, 0)),
        compiler_params=pltpu.CompilerParams(
            dimension_semantics=("parallel",),                 # shards rows across TCs on v7x
        ),
    )(time, x, v)


def init_linear_dynamics_params():
    """Matches nn.Parameter(torch.ones(1) * 0.7)."""
    return jnp.full((1,), 0.7, dtype=jnp.float32)


if __name__ == "__main__":
    key = jax.random.PRNGKey(0)
    k_x, k_v = jax.random.split(key)

    # n-body-system-like shapes: N particles, 3 spatial coordinates.
    n_nodes = 8
    x = jax.random.normal(k_x, (n_nodes, 3), jnp.float32)
    v = jax.random.normal(k_v, (n_nodes, 3), jnp.float32)
    time = init_linear_dynamics_params()

    out = linear_dynamics(x, v, time)
    out = jax.block_until_ready(out)

    ref = x + v * time[0]
    assert out.shape == x.shape and out.dtype == jnp.float32
    assert jnp.allclose(out, ref, atol=1e-6, rtol=1e-6)
    print("KERNEL_OK")
</pallas_src>

<mosaic_0001>
module attributes {stable_mosaic.version = 11 : i64} {
  func.func @_linear_dynamics_kernel(%arg0: i32, %arg1: memref<1xf32, #tpu.memory_space<smem>>, %arg2: memref<8x3xf32, #tpu.memory_space<vmem>>, %arg3: memref<8x3xf32, #tpu.memory_space<vmem>>, %arg4: memref<8x3xf32, #tpu.memory_space<vmem>>) attributes {dimension_semantics = [#tpu.dimension_semantics<parallel>], iteration_bounds = array<i64: 1>, scalar_prefetch = 0 : i64, scratch_operands = 0 : i64, tpu.core_type = #tpu.core_type<tc>, window_params = [{transform_indices = @transform_0, window_bounds = array<i64: 1>}, {transform_indices = @transform_1, window_bounds = array<i64: 8, 3>}, {transform_indices = @transform_2, window_bounds = array<i64: 8, 3>}, {transform_indices = @transform_3, window_bounds = array<i64: 8, 3>}]} {
    %c0 = arith.constant 0 : index
    %0 = memref.load %arg1[%c0] : memref<1xf32, #tpu.memory_space<smem>>
    %c0_0 = arith.constant 0 : index
    %c0_1 = arith.constant 0 : index
    %1 = vector.load %arg2[%c0_0, %c0_1] : memref<8x3xf32, #tpu.memory_space<vmem>>, vector<8x3xf32>
    %c0_2 = arith.constant 0 : index
    %c0_3 = arith.constant 0 : index
    %2 = vector.load %arg3[%c0_2, %c0_3] : memref<8x3xf32, #tpu.memory_space<vmem>>, vector<8x3xf32>
    %3 = vector.broadcast %0 : f32 to vector<8x3xf32>
    %4 = arith.mulf %2, %3 : vector<8x3xf32>
    %5 = arith.addf %1, %4 : vector<8x3xf32>
    %c0_4 = arith.constant 0 : index
    %c0_5 = arith.constant 0 : index
    %6 = vector.load %arg4[%c0_4, %c0_5] : memref<8x3xf32, #tpu.memory_space<vmem>>, vector<8x3xf32>
    tpu.vector_store %arg4[%c0_4, %c0_5], %5 {strides = array<i32>} : memref<8x3xf32, #tpu.memory_space<vmem>>, vector<8x3xf32>,
    return
  }
  func.func @transform_0(%arg0: i32) -> i32 {
    %c0_i32 = arith.constant 0 : i32
    %c0_i32_0 = arith.constant 0 : i32
    return %c0_i32 : i32
  }
  func.func @transform_1(%arg0: i32) -> (i32, i32) {
    %c0_i32 = arith.constant 0 : i32
    %c0_i32_0 = arith.constant 0 : i32
    return %arg0, %c0_i32 : i32, i32
  }
  func.func @transform_2(%arg0: i32) -> (i32, i32) {
    %c0_i32 = arith.constant 0 : i32
    %c0_i32_0 = arith.constant 0 : i32
    return %arg0, %c0_i32 : i32, i32
  }
  func.func @transform_3(%arg0: i32) -> (i32, i32) {
    %c0_i32 = arith.constant 0 : i32
    %c0_i32_0 = arith.constant 0 : i32
    return %arg0, %c0_i32 : i32, i32
  }
}

</mosaic_0001>

<llo_original>
// kernel: tpu_custom_call.1
$region0: #{tpu_custom_call.1}
  #allocation0 [shape = 'u32[]', space=smem, size = 0x4, offset = 0x4, fixed_abs, tag = 'smem constant byte address 0x4 - core index']
  #allocation1 [shape = 'u32[144,128]{1,0:T(1,128)}', space=vmem, size = 0x12000, scoped, tag = 'internal scratch']
  #allocation2 [shape = 'f32[1]{0:T(128)S(6)}', space=smem, size = 0x200, scoped, tag = 'scoped memory for tpu_custom_call.1']
  %s0 = inlined_call_operand.<no memory space> [shape: f32[1], index: 0, kind: input, shape index: {}]
  %s1 = inlined_call_operand.vmem [shape: f32[8,3], index: 1, kind: input, shape index: {}]
  %s2 = inlined_call_operand.vmem [shape: f32[8,3], index: 2, kind: input, shape index: {}]
  %s3 = inlined_call_operand.vmem [shape: f32[8,3], index: 3, kind: output, shape index: {}]
  %s4 = sld [smem:[#allocation0]]
  $region22: #{tpu_custom_call.1} parent=0
    _
  %s6 = ssub.s32 1, %s4
  %s7 = scalar_select 0, %s6, %s4
  %8 = sst [smem:[#allocation2]] %s0
  // Predicated region
  $region2: #{tpu_custom_call.1} parent=0 // pred_check
    _
  $region3: #{tpu_custom_call.1} parent=0 // pred_check_branch
    %10 = sbr.rel (0) target = $region5
  $region4: #{tpu_custom_call.1} parent=0 // pred_region
    _
  $region5: #{tpu_custom_call.1} parent=0 // pred_fallthru
    _
  // Predicated region
  $region6: #{tpu_custom_call.1} parent=0 // pred_check
    _
  $region7: #{tpu_custom_call.1} parent=0 // pred_check_branch
    %12 = sbr.rel (0) target = $region9
  $region8: #{tpu_custom_call.1} parent=0 // pred_region
    _
  $region9: #{tpu_custom_call.1} parent=0 // pred_fallthru
    _
  // Predicated region
  $region10: #{tpu_custom_call.1} parent=0 // pred_check
    _
  $region11: #{tpu_custom_call.1} parent=0 // pred_check_branch
    %14 = sbr.rel (0) target = $region13
  $region12: #{tpu_custom_call.1} parent=0 // pred_region
    _
  $region13: #{tpu_custom_call.1} parent=0 // pred_fallthru
    _
  %s15 = sld [smem:[#allocation2]]
  %v16 = vld [vmem:[%s1] sm:$0xff]
  %v17 = vld [vmem:[%s2] sm:$0xff]
  %v18 = vstv %s15
  %v19 = vmul.f32 %v17, %v18
  %v20 = vadd.f32 %v16, %v19
  %vm21 = vcmask 23552
  %22 = vst.msk [vmem:[%s3] sm:$0xff] %vm21, %v20
  // Predicated region
  $region14: #{tpu_custom_call.1} parent=0 // pred_check
    _
  $region15: #{tpu_custom_call.1} parent=0 // pred_check_branch
    %24 = sbr.rel (0) target = $region17
  $region16: #{tpu_custom_call.1} parent=0 // pred_region
    _
  $region17: #{tpu_custom_call.1} parent=0 // pred_fallthru
    _
  // Predicated region
  $region18: #{tpu_custom_call.1} parent=0 // pred_check
    _
  $region19: #{tpu_custom_call.1} parent=0 // pred_check_branch
    %26 = sbr.rel (0) target = $region21
  $region20: #{tpu_custom_call.1} parent=0 // pred_region
    _
  $region21: #{tpu_custom_call.1} parent=0 // pred_fallthru
    _

</llo_original>
